<compile_context>
chip_gen: v7x
topology: tpu7x:2x2x1
jax: 0.10.0
libtpu: 0.0.40
codegen_flags: <defaults>
</compile_context>

<pallas_src>
import math
import functools

import jax
import jax.numpy as jnp
from jax import lax
from jax.experimental import pallas as pl
from jax.experimental.pallas import tpu as pltpu


def mhca_kernel(tgt_ref, src_ref, wq_ref, wk_ref, wv_ref, wo_ref, o_ref,
                k_sc, v_sc, *, n_heads, masked):
    """One (batch, q-tile) grid step of multi-head cross-attention.

    tgt_ref : (Tq, D)      bf16 query-side rows (target)
    src_ref : (Skv, D)     bf16 key/value-side rows (src), constant per batch
    wq_ref  : (H, D, m)    bf16 per-head W_q with 1/sqrt(m) folded in
    wk_ref  : (H, D, m)    bf16 per-head W_k
    wv_ref  : (H, D, m)    bf16 per-head W_v
    wo_ref  : (H, m, D)    bf16 per-head W_o
    o_ref   : (Tq, D)      output block (heads summed)
    k_sc    : (H, Skv, m)  bf16 VMEM scratch, K projection cached per batch
    v_sc    : (H, Skv, m)  bf16 VMEM scratch, V projection cached per batch
    """
    f32 = jnp.float32
    qi = pl.program_id(1)

    # ---- once per batch: project src -> per-head K / V, cache in VMEM -----
    # (q-tile axis is "arbitrary", so the scratch carries across q tiles; it
    #  is recomputed whenever a new batch starts because qi wraps back to 0.)
    @pl.when(qi == 0)
    def _():
        src = src_ref[...]                                    # (Skv, D) bf16
        for h in range(n_heads):                              # once per batch
            k_sc[h] = jnp.dot(src, wk_ref[h],
                              preferred_element_type=f32).astype(k_sc.dtype)
            v_sc[h] = jnp.dot(src, wv_ref[h],
                              preferred_element_type=f32).astype(v_sc.dtype)

    tgt = tgt_ref[...]                                        # (Tq, D) bf16
    tq, d_model = tgt_ref.shape
    skv = src_ref.shape[0]

    # Causal mask built once per tile and reused by every head.
    if masked:
        row = qi * tq + lax.broadcasted_iota(jnp.int32, (tq, skv), 0)
        col = lax.broadcasted_iota(jnp.int32, (tq, skv), 1)
        keep = row >= col
    else:
        keep = None

    # ---- per-head attention; fori_loop bounds (Tq, Skv) live ranges --------
    # TODO(synk): for very long src sequences, tile the KV axis (flash-style
    # online softmax) instead of holding all of src's K/V resident in VMEM.
    def head_step(h, acc):
        q_h = jnp.dot(tgt, wq_ref[h],                         # (Tq, m), scale folded
                      preferred_element_type=f32).astype(tgt.dtype)
        # Contract over the head dim (same formulation as the reference flash
        # kernel: contraction last-with-last, no explicit K transpose).
        s = lax.dot_general(q_h, k_sc[h], (((1,), (1,)), ((), ())),
                            preferred_element_type=f32)       # (Tq, Skv) f32
        if masked:
            s = jnp.where(keep, s, jnp.float32(-1e30))
        s = s - jnp.max(s, axis=-1, keepdims=True)
        p = jnp.exp(s)
        # EUP reciprocal instead of a VALU divide per (Tq, Skv) element.
        p = p * pl.reciprocal(jnp.sum(p, axis=-1, keepdims=True), approx=True)
        ctx = jnp.dot(p.astype(v_sc.dtype), v_sc[h],
                      preferred_element_type=f32)             # (Tq, m) f32
        # Fold this head straight into the (Tq, D) accumulator (no concat).
        return acc + jnp.dot(ctx.astype(wo_ref.dtype), wo_ref[h],
                             preferred_element_type=f32)

    acc = lax.fori_loop(0, n_heads, head_step, jnp.zeros((tq, d_model), f32))
    # NOTE: lane-dense output stores require D % 128 == 0 (true for the
    # default d_model=512); smaller D falls back to masked stores.
    o_ref[...] = acc.astype(o_ref.dtype)


def _round_up(x, mult):
    return ((x + mult - 1) // mult) * mult


def _padded_bytes(shape, itemsize):
    """VMEM footprint of a tiled buffer (last dim -> x128 lanes, 2nd-minor -> x8)."""
    s = list(shape)
    s[-1] = _round_up(s[-1], 128)
    if len(s) >= 2:
        s[-2] = _round_up(s[-2], 8)
    n = 1
    for d in s:
        n *= d
    return n * itemsize


def multi_head_cross_attention_pallas(src, target, w_q, w_k, w_v, w_o, *,
                                      masked=False, block_q=256):
    """forward(src, target): Q = target, K = V = src (eval-mode forward)."""
    B, s_kv, D = src.shape
    bt, s_q, dt = target.shape
    assert (B, D) == (bt, dt)
    H, _, m = w_q.shape
    out_dtype = target.dtype
    cdt = jnp.bfloat16   # MXU-native matmul input dtype (f32 accumulation in-kernel)

    # Fold the 1/sqrt(m) score scale into W_q and cast weights/activations to
    # bf16 in the wrapper so every in-kernel matmul runs at bf16 MXU rate and
    # HBM/VMEM traffic of src/target/weights is halved.
    scale = 1.0 / math.sqrt(m)
    wq = (w_q * scale).astype(cdt)        # (H, D, m)
    wk = w_k.astype(cdt)
    wv = w_v.astype(cdt)
    wo = w_o.astype(cdt)                  # (H, m, D)
    src_c = src.astype(cdt)
    tgt_c = target.astype(cdt)

    # Tile query rows; pad s_q up to a multiple of the tile instead of
    # collapsing to one giant tile when it doesn't divide.
    bq = min(block_q, s_q)
    n_q = pl.cdiv(s_q, bq)
    s_q_pad = n_q * bq
    if s_q_pad != s_q:
        tgt_c = jnp.pad(tgt_c, ((0, 0), (0, s_q_pad - s_q), (0, 0)))
    grid = (B, n_q)

    # Explicit VMEM budget (double-buffered pipelined blocks + resident K/V
    # scratch + score working set) so the compiler is not capped by the
    # default scoped limit (16 MiB v5e / 32 MiB v6e-v7x).
    # TODO(synk): mark src + weight specs pipeline_mode=pl.Buffered(1) once
    # single-buffering of grid-invariant operands is supported end-to-end.
    out_isz = jnp.dtype(out_dtype).itemsize
    budget = (
        2 * _padded_bytes((bq, D), 2)             # target block (bf16, dbl-buffered)
        + 2 * _padded_bytes((s_kv, D), 2)         # src block
        + 2 * 3 * _padded_bytes((H * D, m), 2)    # W_q / W_k / W_v
        + 2 * _padded_bytes((H * m, D), 2)        # W_o
        + 2 * _padded_bytes((bq, D), out_isz)     # out block
        + 2 * _padded_bytes((H * s_kv, m), 2)     # K / V scratch
        + 4 * _padded_bytes((bq, s_kv), 4)        # score/prob/mask working set
        + 2 * _padded_bytes((bq, D), 4)           # f32 accumulator
    )
    vmem_limit = int(max(32 << 20, min(2 * budget + (4 << 20), 96 << 20)))

    kernel = functools.partial(mhca_kernel, n_heads=H, masked=masked)
    const3 = lambda shp: pl.BlockSpec(shp, lambda b, qi: (0, 0, 0))

    out = pl.pallas_call(
        kernel,
        out_shape=jax.ShapeDtypeStruct((B, s_q_pad, D), out_dtype),
        grid_spec=pltpu.PrefetchScalarGridSpec(
            num_scalar_prefetch=0,
            grid=grid,
            in_specs=[
                pl.BlockSpec((pl.Squeezed(), bq, D),
                             lambda b, qi: (b, qi, 0)),        # target (Q side)
                pl.BlockSpec((pl.Squeezed(), s_kv, D),
                             lambda b, qi: (b, 0, 0)),         # src (K/V side)
                const3((H, D, m)),                             # W_q (scaled)
                const3((H, D, m)),                             # W_k
                const3((H, D, m)),                             # W_v
                const3((H, m, D)),                             # W_o
            ],
            out_specs=pl.BlockSpec((pl.Squeezed(), bq, D),
                                   lambda b, qi: (b, qi, 0)),
            scratch_shapes=[pltpu.VMEM((H, s_kv, m), cdt),     # K cache (per batch)
                            pltpu.VMEM((H, s_kv, m), cdt)],    # V cache (per batch)
        ),
        compiler_params=pltpu.CompilerParams(
            # batch axis "parallel" (megacore shards it on v7x); q-tile axis
            # "arbitrary" so the per-batch K/V scratch carries across q tiles.
            dimension_semantics=("parallel", "arbitrary"),
            vmem_limit_bytes=vmem_limit),
    )(tgt_c, src_c, wq, wk, wv, wo)

    return out[:, :s_q] if s_q_pad != s_q else out


# ------------------- pure-JAX reference (sanity check) -------------------
def mhca_ref(src, target, w_q, w_k, w_v, w_o, masked=False):
    m = w_q.shape[-1]
    q = jnp.einsum("bqd,hdm->bhqm", target, w_q)
    k = jnp.einsum("bkd,hdm->bhkm", src, w_k)
    v = jnp.einsum("bkd,hdm->bhkm", src, w_v)
    s = jnp.einsum("bhqm,bhkm->bhqk", q, k) / math.sqrt(m)
    if masked:
        sq, sk = s.shape[-2:]
        causal = jnp.arange(sq)[:, None] >= jnp.arange(sk)[None, :]
        s = jnp.where(causal, s, -jnp.inf)
    p = jax.nn.softmax(s, axis=-1)
    heads = jnp.einsum("bhqk,bhkm->bhqm", p, v)
    return jnp.einsum("bhqm,hmd->bqd", heads, w_o)


if __name__ == "__main__":
    B, S_Q, S_KV, D, H = 2, 8, 16, 32, 4
    m = D // H

    root = jax.random.PRNGKey(0)
    k1, k2, k3, k4, k5, k6 = jax.random.split(root, 6)
    src = jax.random.normal(k1, (B, S_KV, D), jnp.float32)
    target = jax.random.normal(k2, (B, S_Q, D), jnp.float32)

    # kaiming_uniform_(a=sqrt(5)) bound ~= 1/sqrt(fan_in) with fan_in = D*m / m*D
    bnd = 1.0 / math.sqrt(D * m)
    w_q = jax.random.uniform(k3, (H, D, m), jnp.float32, -bnd, bnd)
    w_k = jax.random.uniform(k4, (H, D, m), jnp.float32, -bnd, bnd)
    w_v = jax.random.uniform(k5, (H, D, m), jnp.float32, -bnd, bnd)
    w_o = jax.random.uniform(k6, (H, m, D), jnp.float32, -bnd, bnd)

    for msk in (False, True):
        out = multi_head_cross_attention_pallas(src, target, w_q, w_k, w_v, w_o,
                                                masked=msk)
        out = jax.block_until_ready(out)
        ref = mhca_ref(src, target, w_q, w_k, w_v, w_o, masked=msk)
        assert out.shape == (B, S_Q, D)
        # bf16 MXU inputs + approx reciprocal -> looser tolerance vs f32 ref.
        assert jnp.allclose(out, ref, atol=2e-2, rtol=2e-2), \
            f"mismatch vs reference (masked={msk})"

    print("KERNEL_OK")
</pallas_src>

<mosaic_0001>
module attributes {stable_mosaic.version = 11 : i64} {
  func.func @mhca_kernel(%arg0: i32, %arg1: i32, %arg2: memref<1x8x32xbf16, #tpu.memory_space<vmem>>, %arg3: memref<1x16x32xbf16, #tpu.memory_space<vmem>>, %arg4: memref<4x32x8xbf16, #tpu.memory_space<vmem>>, %arg5: memref<4x32x8xbf16, #tpu.memory_space<vmem>>, %arg6: memref<4x32x8xbf16, #tpu.memory_space<vmem>>, %arg7: memref<4x8x32xbf16, #tpu.memory_space<vmem>>, %arg8: memref<1x8x32xf32, #tpu.memory_space<vmem>>, %arg9: memref<4x16x8xbf16, #tpu.memory_space<vmem>>, %arg10: memref<4x16x8xbf16, #tpu.memory_space<vmem>>) attributes {dimension_semantics = [#tpu.dimension_semantics<parallel>, #tpu.dimension_semantics<arbitrary>], iteration_bounds = array<i64: 2, 1>, scalar_prefetch = 0 : i64, scratch_operands = 2 : i64, tpu.core_type = #tpu.core_type<tc>, window_params = [{transform_indices = @transform_0, window_bounds = array<i64: 1, 8, 32>}, {transform_indices = @transform_1, window_bounds = array<i64: 1, 16, 32>}, {pipeline_mode = #tpu.pipeline_mode<synchronous>, transform_indices = @transform_2, window_bounds = array<i64: 4, 32, 8>}, {pipeline_mode = #tpu.pipeline_mode<synchronous>, transform_indices = @transform_3, window_bounds = array<i64: 4, 32, 8>}, {pipeline_mode = #tpu.pipeline_mode<synchronous>, transform_indices = @transform_4, window_bounds = array<i64: 4, 32, 8>}, {pipeline_mode = #tpu.pipeline_mode<synchronous>, transform_indices = @transform_5, window_bounds = array<i64: 4, 8, 32>}, {transform_indices = @transform_6, window_bounds = array<i64: 1, 8, 32>}]} {
    %c0_i32 = arith.constant 0 : i32
    %0 = arith.cmpi eq, %arg1, %c0_i32 : i32
    %1 = arith.extui %0 : i1 to i32
    %c0_i32_0 = arith.constant 0 : i32
    %2 = arith.cmpi ne, %1, %c0_i32_0 : i32
    scf.if %2 {
      %c0_8 = arith.constant 0 : index
      %c0_9 = arith.constant 0 : index
      %c0_10 = arith.constant 0 : index
      %11 = vector.load %arg3[%c0_8, %c0_9, %c0_10] : memref<1x16x32xbf16, #tpu.memory_space<vmem>>, vector<1x16x32xbf16>
      %12 = vector.shape_cast %11 : vector<1x16x32xbf16> to vector<16x32xbf16>
      %c0_11 = arith.constant 0 : index
      %c0_12 = arith.constant 0 : index
      %c0_13 = arith.constant 0 : index
      %13 = vector.load %arg5[%c0_11, %c0_12, %c0_13] : memref<4x32x8xbf16, #tpu.memory_space<vmem>>, vector<1x32x8xbf16>
      %14 = vector.shape_cast %13 : vector<1x32x8xbf16> to vector<32x8xbf16>
      %cst_14 = arith.constant dense<0.000000e+00> : vector<16x8xf32>
      %15 = tpu.matmul %12, %14, %cst_14 {dimension_numbers = #tpu.dot_dimension_numbers<[1], [0], [0], [1], [0, 0, 1, 1], [], []>} : vector<16x32xbf16>, vector<32x8xbf16>, vector<16x8xf32> -> vector<16x8xf32>
      %16 = arith.truncf %15 : vector<16x8xf32> to vector<16x8xbf16>
      %c0_15 = arith.constant 0 : index
      %c0_16 = arith.constant 0 : index
      %c0_17 = arith.constant 0 : index
      %17 = vector.load %arg9[%c0_15, %c0_16, %c0_17] : memref<4x16x8xbf16, #tpu.memory_space<vmem>>, vector<1x16x8xbf16>
      %18 = vector.shape_cast %17 : vector<1x16x8xbf16> to vector<16x8xbf16>
      %19 = vector.shape_cast %16 : vector<16x8xbf16> to vector<1x16x8xbf16>
      tpu.vector_store %arg9[%c0_15, %c0_16, %c0_17], %19 {strides = array<i32>} : memref<4x16x8xbf16, #tpu.memory_space<vmem>>, vector<1x16x8xbf16>,
      %c0_18 = arith.constant 0 : index
      %c0_19 = arith.constant 0 : index
      %c0_20 = arith.constant 0 : index
      %20 = vector.load %arg6[%c0_18, %c0_19, %c0_20] : memref<4x32x8xbf16, #tpu.memory_space<vmem>>, vector<1x32x8xbf16>
      %21 = vector.shape_cast %20 : vector<1x32x8xbf16> to vector<32x8xbf16>
      %cst_21 = arith.constant dense<0.000000e+00> : vector<16x8xf32>
      %22 = tpu.matmul %12, %21, %cst_21 {dimension_numbers = #tpu.dot_dimension_numbers<[1], [0], [0], [1], [0, 0, 1, 1], [], []>} : vector<16x32xbf16>, vector<32x8xbf16>, vector<16x8xf32> -> vector<16x8xf32>
      %23 = arith.truncf %22 : vector<16x8xf32> to vector<16x8xbf16>
      %c0_22 = arith.constant 0 : index
      %c0_23 = arith.constant 0 : index
      %c0_24 = arith.constant 0 : index
      %24 = vector.load %arg10[%c0_22, %c0_23, %c0_24] : memref<4x16x8xbf16, #tpu.memory_space<vmem>>, vector<1x16x8xbf16>
      %25 = vector.shape_cast %24 : vector<1x16x8xbf16> to vector<16x8xbf16>
      %26 = vector.shape_cast %23 : vector<16x8xbf16> to vector<1x16x8xbf16>
      tpu.vector_store %arg10[%c0_22, %c0_23, %c0_24], %26 {strides = array<i32>} : memref<4x16x8xbf16, #tpu.memory_space<vmem>>, vector<1x16x8xbf16>,
      %c1 = arith.constant 1 : index
      %c0_25 = arith.constant 0 : index
      %c0_26 = arith.constant 0 : index
      %27 = vector.load %arg5[%c1, %c0_25, %c0_26] : memref<4x32x8xbf16, #tpu.memory_space<vmem>>, vector<1x32x8xbf16>
      %28 = vector.shape_cast %27 : vector<1x32x8xbf16> to vector<32x8xbf16>
      %cst_27 = arith.constant dense<0.000000e+00> : vector<16x8xf32>
      %29 = tpu.matmul %12, %28, %cst_27 {dimension_numbers = #tpu.dot_dimension_numbers<[1], [0], [0], [1], [0, 0, 1, 1], [], []>} : vector<16x32xbf16>, vector<32x8xbf16>, vector<16x8xf32> -> vector<16x8xf32>
      %30 = arith.truncf %29 : vector<16x8xf32> to vector<16x8xbf16>
      %c1_28 = arith.constant 1 : index
      %c0_29 = arith.constant 0 : index
      %c0_30 = arith.constant 0 : index
      %31 = vector.load %arg9[%c1_28, %c0_29, %c0_30] : memref<4x16x8xbf16, #tpu.memory_space<vmem>>, vector<1x16x8xbf16>
      %32 = vector.shape_cast %31 : vector<1x16x8xbf16> to vector<16x8xbf16>
      %33 = vector.shape_cast %30 : vector<16x8xbf16> to vector<1x16x8xbf16>
      tpu.vector_store %arg9[%c1_28, %c0_29, %c0_30], %33 {strides = array<i32>} : memref<4x16x8xbf16, #tpu.memory_space<vmem>>, vector<1x16x8xbf16>,
      %c1_31 = arith.constant 1 : index
      %c0_32 = arith.constant 0 : index
      %c0_33 = arith.constant 0 : index
      %34 = vector.load %arg6[%c1_31, %c0_32, %c0_33] : memref<4x32x8xbf16, #tpu.memory_space<vmem>>, vector<1x32x8xbf16>
      %35 = vector.shape_cast %34 : vector<1x32x8xbf16> to vector<32x8xbf16>
      %cst_34 = arith.constant dense<0.000000e+00> : vector<16x8xf32>
      %36 = tpu.matmul %12, %35, %cst_34 {dimension_numbers = #tpu.dot_dimension_numbers<[1], [0], [0], [1], [0, 0, 1, 1], [], []>} : vector<16x32xbf16>, vector<32x8xbf16>, vector<16x8xf32> -> vector<16x8xf32>
      %37 = arith.truncf %36 : vector<16x8xf32> to vector<16x8xbf16>
      %c1_35 = arith.constant 1 : index
      %c0_36 = arith.constant 0 : index
      %c0_37 = arith.constant 0 : index
      %38 = vector.load %arg10[%c1_35, %c0_36, %c0_37] : memref<4x16x8xbf16, #tpu.memory_space<vmem>>, vector<1x16x8xbf16>
      %39 = vector.shape_cast %38 : vector<1x16x8xbf16> to vector<16x8xbf16>
      %40 = vector.shape_cast %37 : vector<16x8xbf16> to vector<1x16x8xbf16>
      tpu.vector_store %arg10[%c1_35, %c0_36, %c0_37], %40 {strides = array<i32>} : memref<4x16x8xbf16, #tpu.memory_space<vmem>>, vector<1x16x8xbf16>,
      %c2 = arith.constant 2 : index
      %c0_38 = arith.constant 0 : index
      %c0_39 = arith.constant 0 : index
      %41 = vector.load %arg5[%c2, %c0_38, %c0_39] : memref<4x32x8xbf16, #tpu.memory_space<vmem>>, vector<1x32x8xbf16>
      %42 = vector.shape_cast %41 : vector<1x32x8xbf16> to vector<32x8xbf16>
      %cst_40 = arith.constant dense<0.000000e+00> : vector<16x8xf32>
      %43 = tpu.matmul %12, %42, %cst_40 {dimension_numbers = #tpu.dot_dimension_numbers<[1], [0], [0], [1], [0, 0, 1, 1], [], []>} : vector<16x32xbf16>, vector<32x8xbf16>, vector<16x8xf32> -> vector<16x8xf32>
      %44 = arith.truncf %43 : vector<16x8xf32> to vector<16x8xbf16>
      %c2_41 = arith.constant 2 : index
      %c0_42 = arith.constant 0 : index
      %c0_43 = arith.constant 0 : index
      %45 = vector.load %arg9[%c2_41, %c0_42, %c0_43] : memref<4x16x8xbf16, #tpu.memory_space<vmem>>, vector<1x16x8xbf16>
      %46 = vector.shape_cast %45 : vector<1x16x8xbf16> to vector<16x8xbf16>
      %47 = vector.shape_cast %44 : vector<16x8xbf16> to vector<1x16x8xbf16>
      tpu.vector_store %arg9[%c2_41, %c0_42, %c0_43], %47 {strides = array<i32>} : memref<4x16x8xbf16, #tpu.memory_space<vmem>>, vector<1x16x8xbf16>,
      %c2_44 = arith.constant 2 : index
      %c0_45 = arith.constant 0 : index
      %c0_46 = arith.constant 0 : index
      %48 = vector.load %arg6[%c2_44, %c0_45, %c0_46] : memref<4x32x8xbf16, #tpu.memory_space<vmem>>, vector<1x32x8xbf16>
      %49 = vector.shape_cast %48 : vector<1x32x8xbf16> to vector<32x8xbf16>
      %cst_47 = arith.constant dense<0.000000e+00> : vector<16x8xf32>
      %50 = tpu.matmul %12, %49, %cst_47 {dimension_numbers = #tpu.dot_dimension_numbers<[1], [0], [0], [1], [0, 0, 1, 1], [], []>} : vector<16x32xbf16>, vector<32x8xbf16>, vector<16x8xf32> -> vector<16x8xf32>
      %51 = arith.truncf %50 : vector<16x8xf32> to vector<16x8xbf16>
      %c2_48 = arith.constant 2 : index
      %c0_49 = arith.constant 0 : index
      %c0_50 = arith.constant 0 : index
      %52 = vector.load %arg10[%c2_48, %c0_49, %c0_50] : memref<4x16x8xbf16, #tpu.memory_space<vmem>>, vector<1x16x8xbf16>
      %53 = vector.shape_cast %52 : vector<1x16x8xbf16> to vector<16x8xbf16>
      %54 = vector.shape_cast %51 : vector<16x8xbf16> to vector<1x16x8xbf16>
      tpu.vector_store %arg10[%c2_48, %c0_49, %c0_50], %54 {strides = array<i32>} : memref<4x16x8xbf16, #tpu.memory_space<vmem>>, vector<1x16x8xbf16>,
      %c3 = arith.constant 3 : index
      %c0_51 = arith.constant 0 : index
      %c0_52 = arith.constant 0 : index
      %55 = vector.load %arg5[%c3, %c0_51, %c0_52] : memref<4x32x8xbf16, #tpu.memory_space<vmem>>, vector<1x32x8xbf16>
      %56 = vector.shape_cast %55 : vector<1x32x8xbf16> to vector<32x8xbf16>
      %cst_53 = arith.constant dense<0.000000e+00> : vector<16x8xf32>
      %57 = tpu.matmul %12, %56, %cst_53 {dimension_numbers = #tpu.dot_dimension_numbers<[1], [0], [0], [1], [0, 0, 1, 1], [], []>} : vector<16x32xbf16>, vector<32x8xbf16>, vector<16x8xf32> -> vector<16x8xf32>
      %58 = arith.truncf %57 : vector<16x8xf32> to vector<16x8xbf16>
      %c3_54 = arith.constant 3 : index
      %c0_55 = arith.constant 0 : index
      %c0_56 = arith.constant 0 : index
      %59 = vector.load %arg9[%c3_54, %c0_55, %c0_56] : memref<4x16x8xbf16, #tpu.memory_space<vmem>>, vector<1x16x8xbf16>
      %60 = vector.shape_cast %59 : vector<1x16x8xbf16> to vector<16x8xbf16>
      %61 = vector.shape_cast %58 : vector<16x8xbf16> to vector<1x16x8xbf16>
      tpu.vector_store %arg9[%c3_54, %c0_55, %c0_56], %61 {strides = array<i32>} : memref<4x16x8xbf16, #tpu.memory_space<vmem>>, vector<1x16x8xbf16>,
      %c3_57 = arith.constant 3 : index
      %c0_58 = arith.constant 0 : index
      %c0_59 = arith.constant 0 : index
      %62 = vector.load %arg6[%c3_57, %c0_58, %c0_59] : memref<4x32x8xbf16, #tpu.memory_space<vmem>>, vector<1x32x8xbf16>
      %63 = vector.shape_cast %62 : vector<1x32x8xbf16> to vector<32x8xbf16>
      %cst_60 = arith.constant dense<0.000000e+00> : vector<16x8xf32>
      %64 = tpu.matmul %12, %63, %cst_60 {dimension_numbers = #tpu.dot_dimension_numbers<[1], [0], [0], [1], [0, 0, 1, 1], [], []>} : vector<16x32xbf16>, vector<32x8xbf16>, vector<16x8xf32> -> vector<16x8xf32>
      %65 = arith.truncf %64 : vector<16x8xf32> to vector<16x8xbf16>
      %c3_61 = arith.constant 3 : index
      %c0_62 = arith.constant 0 : index
      %c0_63 = arith.constant 0 : index
      %66 = vector.load %arg10[%c3_61, %c0_62, %c0_63] : memref<4x16x8xbf16, #tpu.memory_space<vmem>>, vector<1x16x8xbf16>
      %67 = vector.shape_cast %66 : vector<1x16x8xbf16> to vector<16x8xbf16>
      %68 = vector.shape_cast %65 : vector<16x8xbf16> to vector<1x16x8xbf16>
      tpu.vector_store %arg10[%c3_61, %c0_62, %c0_63], %68 {strides = array<i32>} : memref<4x16x8xbf16, #tpu.memory_space<vmem>>, vector<1x16x8xbf16>,
    } else {
    }
    %c0 = arith.constant 0 : index
    %c0_1 = arith.constant 0 : index
    %c0_2 = arith.constant 0 : index
    %3 = vector.load %arg2[%c0, %c0_1, %c0_2] : memref<1x8x32xbf16, #tpu.memory_space<vmem>>, vector<1x8x32xbf16>
    %4 = vector.shape_cast %3 : vector<1x8x32xbf16> to vector<8x32xbf16>
    %cst = arith.constant 0.000000e+00 : f32
    %5 = vector.broadcast %cst : f32 to vector<8x32xf32>
    %c0_i32_3 = arith.constant 0 : i32
    %c4_i32 = arith.constant 4 : i32
    %6 = arith.addi %c0_i32_3, %c4_i32 : i32
    %c1_i32 = arith.constant 1 : i32
    %7 = scf.for %arg11 = %c0_i32_3 to %6 step %c1_i32 iter_args(%arg12 = %5) -> (vector<8x32xf32>)  : i32 {
      %11 = arith.index_cast %arg11 : i32 to index
      %c0_8 = arith.constant 0 : index
      %c0_9 = arith.constant 0 : index
      %12 = vector.load %arg4[%11, %c0_8, %c0_9] : memref<4x32x8xbf16, #tpu.memory_space<vmem>>, vector<1x32x8xbf16>
      %13 = vector.shape_cast %12 : vector<1x32x8xbf16> to vector<32x8xbf16>
      %cst_10 = arith.constant dense<0.000000e+00> : vector<8x8xf32>
      %14 = tpu.matmul %4, %13, %cst_10 {dimension_numbers = #tpu.dot_dimension_numbers<[1], [0], [0], [1], [0, 0, 1, 1], [], []>} : vector<8x32xbf16>, vector<32x8xbf16>, vector<8x8xf32> -> vector<8x8xf32>
      %15 = arith.truncf %14 : vector<8x8xf32> to vector<8x8xbf16>
      %16 = arith.index_cast %arg11 : i32 to index
      %c0_11 = arith.constant 0 : index
      %c0_12 = arith.constant 0 : index
      %17 = vector.load %arg9[%16, %c0_11, %c0_12] : memref<4x16x8xbf16, #tpu.memory_space<vmem>>, vector<1x16x8xbf16>
      %18 = vector.shape_cast %17 : vector<1x16x8xbf16> to vector<16x8xbf16>
      %cst_13 = arith.constant dense<0.000000e+00> : vector<8x16xf32>
      %19 = tpu.matmul %15, %18, %cst_13 {dimension_numbers = #tpu.dot_dimension_numbers<[1], [1], [0], [0], [0, 0, 1, 0], [], []>} : vector<8x8xbf16>, vector<16x8xbf16>, vector<8x16xf32> -> vector<8x16xf32>
      %cst_14 = arith.constant dense<0xFF800000> : vector<8xf32>
      %20 = vector.multi_reduction <maximumf>, %19, %cst_14 [1] : vector<8x16xf32> to vector<8xf32>
      %21 = vector.shape_cast %20 : vector<8xf32> to vector<8x1xf32>
      %22 = vector.broadcast %21 : vector<8x1xf32> to vector<8x16xf32>
      %23 = arith.subf %19, %22 : vector<8x16xf32>
      %24 = math.exp %23 : vector<8x16xf32>
      %cst_15 = arith.constant dense<0.000000e+00> : vector<8xf32>
      %25 = vector.multi_reduction <add>, %24, %cst_15 [1] : vector<8x16xf32> to vector<8xf32>
      %26 = vector.shape_cast %25 : vector<8xf32> to vector<8x1xf32>
      %27 = tpu.reciprocal %26 {approx = true} : vector<8x1xf32> -> vector<8x1xf32>
      %28 = vector.broadcast %27 : vector<8x1xf32> to vector<8x16xf32>
      %29 = arith.mulf %24, %28 : vector<8x16xf32>
      %30 = arith.truncf %29 : vector<8x16xf32> to vector<8x16xbf16>
      %31 = arith.index_cast %arg11 : i32 to index
      %c0_16 = arith.constant 0 : index
      %c0_17 = arith.constant 0 : index
      %32 = vector.load %arg10[%31, %c0_16, %c0_17] : memref<4x16x8xbf16, #tpu.memory_space<vmem>>, vector<1x16x8xbf16>
      %33 = vector.shape_cast %32 : vector<1x16x8xbf16> to vector<16x8xbf16>
      %cst_18 = arith.constant dense<0.000000e+00> : vector<8x8xf32>
      %34 = tpu.matmul %30, %33, %cst_18 {dimension_numbers = #tpu.dot_dimension_numbers<[1], [0], [0], [1], [0, 0, 1, 1], [], []>} : vector<8x16xbf16>, vector<16x8xbf16>, vector<8x8xf32> -> vector<8x8xf32>
      %35 = arith.truncf %34 : vector<8x8xf32> to vector<8x8xbf16>
      %36 = arith.index_cast %arg11 : i32 to index
      %c0_19 = arith.constant 0 : index
      %c0_20 = arith.constant 0 : index
      %37 = vector.load %arg7[%36, %c0_19, %c0_20] : memref<4x8x32xbf16, #tpu.memory_space<vmem>>, vector<1x8x32xbf16>
      %38 = vector.shape_cast %37 : vector<1x8x32xbf16> to vector<8x32xbf16>
      %cst_21 = arith.constant dense<0.000000e+00> : vector<8x32xf32>
      %39 = tpu.matmul %35, %38, %cst_21 {dimension_numbers = #tpu.dot_dimension_numbers<[1], [0], [0], [1], [0, 0, 1, 1], [], []>} : vector<8x8xbf16>, vector<8x32xbf16>, vector<8x32xf32> -> vector<8x32xf32>
      %40 = arith.addf %arg12, %39 : vector<8x32xf32>
      scf.yield %40 : vector<8x32xf32>
    }
    %c4_i32_4 = arith.constant 4 : i32
    %c0_5 = arith.constant 0 : index
    %c0_6 = arith.constant 0 : index
    %c0_7 = arith.constant 0 : index
    %8 = vector.load %arg8[%c0_5, %c0_6, %c0_7] : memref<1x8x32xf32, #tpu.memory_space<vmem>>, vector<1x8x32xf32>
    %9 = vector.shape_cast %8 : vector<1x8x32xf32> to vector<8x32xf32>
    %10 = vector.shape_cast %7 : vector<8x32xf32> to vector<1x8x32xf32>
    tpu.vector_store %arg8[%c0_5, %c0_6, %c0_7], %10 {strides = array<i32>} : memref<1x8x32xf32, #tpu.memory_space<vmem>>, vector<1x8x32xf32>,
    return
  }
  func.func @transform_0(%arg0: i32, %arg1: i32) -> (i32, i32, i32) {
    %c0_i32 = arith.constant 0 : i32
    %c0_i32_0 = arith.constant 0 : i32
    return %arg0, %arg1, %c0_i32 : i32, i32, i32
  }
  func.func @transform_1(%arg0: i32, %arg1: i32) -> (i32, i32, i32) {
    %c0_i32 = arith.constant 0 : i32
    %c0_i32_0 = arith.constant 0 : i32
    %c0_i32_1 = arith.constant 0 : i32
    return %arg0, %c0_i32, %c0_i32_0 : i32, i32, i32
  }
  func.func @transform_2(%arg0: i32, %arg1: i32) -> (i32, i32, i32) {
    %c0_i32 = arith.constant 0 : i32
    %c0_i32_0 = arith.constant 0 : i32
    %c0_i32_1 = arith.constant 0 : i32
    %c0_i32_2 = arith.constant 0 : i32
    return %c0_i32, %c0_i32_0, %c0_i32_1 : i32, i32, i32
  }
  func.func @transform_3(%arg0: i32, %arg1: i32) -> (i32, i32, i32) {
    %c0_i32 = arith.constant 0 : i32
    %c0_i32_0 = arith.constant 0 : i32
    %c0_i32_1 = arith.constant 0 : i32
    %c0_i32_2 = arith.constant 0 : i32
    return %c0_i32, %c0_i32_0, %c0_i32_1 : i32, i32, i32
  }
  func.func @transform_4(%arg0: i32, %arg1: i32) -> (i32, i32, i32) {
    %c0_i32 = arith.constant 0 : i32
    %c0_i32_0 = arith.constant 0 : i32
    %c0_i32_1 = arith.constant 0 : i32
    %c0_i32_2 = arith.constant 0 : i32
    return %c0_i32, %c0_i32_0, %c0_i32_1 : i32, i32, i32
  }
  func.func @transform_5(%arg0: i32, %arg1: i32) -> (i32, i32, i32) {
    %c0_i32 = arith.constant 0 : i32
    %c0_i32_0 = arith.constant 0 : i32
    %c0_i32_1 = arith.constant 0 : i32
    %c0_i32_2 = arith.constant 0 : i32
    return %c0_i32, %c0_i32_0, %c0_i32_1 : i32, i32, i32
  }
  func.func @transform_6(%arg0: i32, %arg1: i32) -> (i32, i32, i32) {
    %c0_i32 = arith.constant 0 : i32
    %c0_i32_0 = arith.constant 0 : i32
    return %arg0, %arg1, %c0_i32 : i32, i32, i32
  }
}

</mosaic_0001>

<llo_original>
// kernel: tpu_custom_call.1
$region0: #{tpu_custom_call.1}
  #allocation0 [shape = 'u32[]', space=smem, size = 0x4, offset = 0x4, fixed_abs, tag = 'smem constant byte address 0x4 - core index']
  #allocation1 [shape = 'u32[144,128]{1,0:T(1,128)}', space=vmem, size = 0x12000, scoped, tag = 'internal scratch']
  #allocation2 [shape = 'bf16[4,16,8]{2,1,0:T(16,128)(2,1)}', space=vmem, size = 0x4000, scoped, tag = 'scratch operand']
  #allocation3 [shape = 'bf16[4,16,8]{2,1,0:T(16,128)(2,1)}', space=vmem, size = 0x4000, scoped, tag = 'scratch operand']
  %s0 = inlined_call_operand.vmem [shape: bf16[2,8,32], index: 0, kind: input, shape index: {}]
  %s1 = inlined_call_operand.vmem [shape: bf16[2,16,32], index: 1, kind: input, shape index: {}]
  %s2 = inlined_call_operand.vmem [shape: bf16[4,32,8], index: 2, kind: input, shape index: {}]
  %s3 = inlined_call_operand.vmem [shape: bf16[4,32,8], index: 3, kind: input, shape index: {}]
  %s4 = inlined_call_operand.vmem [shape: bf16[4,32,8], index: 4, kind: input, shape index: {}]
  %s5 = inlined_call_operand.vmem [shape: bf16[4,8,32], index: 5, kind: input, shape index: {}]
  %s6 = inlined_call_operand.hbm [shape: f32[2,8,32], index: 6, kind: output, shape index: {}]
  %s7 = sld [smem:[#allocation0]]
  $region68: #{tpu_custom_call.1} parent=0
    _
  %s9 = ssub.s32 1, %s7
  %s10 = scalar_select 0, %s9, %s7
  $region1: #{tpu_custom_call.1} parent=0
    #allocation4 [shape = 'u8[8192]{0}', space=vmem, size = 0x2000, scoped, tag = 'output window, operand 0']
    #allocation5 [shape = 's32[2]{0}', space=sflag, size = 0x8, scoped, tag = 'scoped memory for tpu_custom_call.1']
    %11 = vsyncpa [#allocation5], 0
    %s12 = scalar_lea.sflag [#allocation5], 1
    %13 = vsyncpa %s12, 0
    loop: start=0, step=1, limit=4
    $region2: #{tpu_custom_call.1} parent=1 // loop_pre_header
      _
    $region3: #{tpu_custom_call.1} parent=1 // loop_header
      %s15 = sphi 0, %s19
      %p16 = scmp.ge.s32.totalorder %s15, 4
      %s22 = sphi 0, %s34
      %s23 = sphi 0, %s30
      %s24 = sphi 0, %s22
      %s25 = sphi 0, %s23
      %s26 = sphi 0, %s24
      %s27 = sphi 0, %s25
      %s39 = sphi 0, %s41
      %s42 = sphi 0, %s39
      %s43 = sphi 0, %s42
      %s59 = sphi 0, %s43
      %s65 = sphi 0, %s67
      %s68 = sphi 0, %s65
      %s69 = sphi 0, %s68
      %s85 = sphi 0, %s69
      %s89 = sphi 0, %s89
      %s91 = sphi 0, %s89
      %s92 = sphi 0, %s91
      %s106 = sphi 0, %s92
      %s110 = sphi 0, %s110
      %s112 = sphi 0, %s110
      %s113 = sphi 0, %s112
      %s127 = sphi 0, %s113
      %s131 = sphi 0, %s131
      %s133 = sphi 0, %s131
      %s134 = sphi 0, %s133
      %s148 = sphi 0, %s134
      %s152 = sphi 0, %s152
      %s154 = sphi 0, %s152
      %s155 = sphi 0, %s154
      %s169 = sphi 0, %s155
      %s177 = sphi 0, %s179
      %s180 = sphi 0, %s177
      %s181 = sphi 0, %s180
      %s197 = sphi 0, %s181
    $region4: #{tpu_custom_call.1} parent=1 // loop_header_branch
      %18 = sbr.rel (%p16) target = $region8
    $region5: #{tpu_custom_call.1} parent=1 // loop_body
      %s20 = ssub.s32 %s15, 1
      %s21 = ssub.s32 %s15, 2
      %s28 = sadd.s32 1, %s23
      %p29 = scmp.ge.s32.totalorder %s28, 1
      %s30 = scalar_select %p29, 0, %s28
      %s31 = sadd.s32 1, %s22
      %s32 = scalar_select %p29, %s31, %s22
      %p33 = scmp.ge.s32.totalorder %s32, 2
      %s34 = scalar_select %p33, 0, %s32
      %s35 = ssub.s32 %s22, %s34
      %s36 = ssub.s32 %s23, %s30
      %s37 = sor.u32 %s35, %s36
      %p38 = scmp.eq.s32.totalorder %s37, 0
      %s40 = sadd.s32 %s39, 1
      %s41 = scalar_select %p38, %s39, %s40
      %p44 = pneg %p38
      %p45 = scmp.eq.s32.totalorder %s15, 1
      %p46 = por %p44, %p45
      %p47 = scmp.ne.s32.totalorder %s39, %s42
      %p48 = scmp.eq.s32.totalorder %s15, 0
      %p49 = por %p47, %p48
      %p50 = scmp.ne.s32.totalorder %s39, %s42
      %p51 = scmp.eq.s32.totalorder %s20, 1
      %p52 = por %p50, %p51
      %p53 = scmp.ne.s32.totalorder %s42, %s43
      %p54 = scmp.eq.s32.totalorder %s20, 0
      %p55 = por %p53, %p54
      %p56 = scmp.ne.s32.totalorder %s42, %s43
      %p57 = scmp.eq.s32.totalorder %s21, 1
      %p58 = por %p56, %p57
      %p60 = scmp.ne.s32.totalorder %s43, %s59
      %p61 = scmp.eq.s32.totalorder %s21, 0
      %p62 = por %p60, %p61
      %s63 = ssub.s32 %s22, %s34
      %p64 = scmp.eq.s32.totalorder %s63, 0
      %s66 = sadd.s32 %s65, 1
      %s67 = scalar_select %p64, %s65, %s66
      %p70 = pneg %p64
      %p71 = scmp.eq.s32.totalorder %s15, 1
      %p72 = por %p70, %p71
      %p73 = scmp.ne.s32.totalorder %s65, %s68
      %p74 = scmp.eq.s32.totalorder %s15, 0
      %p75 = por %p73, %p74
      %p76 = scmp.ne.s32.totalorder %s65, %s68
      %p77 = scmp.eq.s32.totalorder %s20, 1
      %p78 = por %p76, %p77
      %p79 = scmp.ne.s32.totalorder %s68, %s69
      %p80 = scmp.eq.s32.totalorder %s20, 0
      %p81 = por %p79, %p80
      %p82 = scmp.ne.s32.totalorder %s68, %s69
      %p83 = scmp.eq.s32.totalorder %s21, 1
      %p84 = por %p82, %p83
      %p86 = scmp.ne.s32.totalorder %s69, %s85
      %p87 = scmp.eq.s32.totalorder %s21, 0
      %p88 = por %p86, %p87
      %s90 = sadd.s32 %s89, 1
      %p93 = scmp.eq.s32.totalorder %s15, 1
      %p94 = scmp.ne.s32.totalorder %s89, %s91
      %p95 = scmp.eq.s32.totalorder %s15, 0
      %p96 = por %p94, %p95
      %p97 = scmp.ne.s32.totalorder %s89, %s91
      %p98 = scmp.eq.s32.totalorder %s20, 1
      %p99 = por %p97, %p98
      %p100 = scmp.ne.s32.totalorder %s91, %s92
      %p101 = scmp.eq.s32.totalorder %s20, 0
      %p102 = por %p100, %p101
      %p103 = scmp.ne.s32.totalorder %s91, %s92
      %p104 = scmp.eq.s32.totalorder %s21, 1
      %p105 = por %p103, %p104
      %p107 = scmp.ne.s32.totalorder %s92, %s106
      %p108 = scmp.eq.s32.totalorder %s21, 0
      %p109 = por %p107, %p108
      %s111 = sadd.s32 %s110, 1
      %p114 = scmp.eq.s32.totalorder %s15, 1
      %p115 = scmp.ne.s32.totalorder %s110, %s112
      %p116 = scmp.eq.s32.totalorder %s15, 0
      %p117 = por %p115, %p116
      %p118 = scmp.ne.s32.totalorder %s110, %s112
      %p119 = scmp.eq.s32.totalorder %s20, 1
      %p120 = por %p118, %p119
      %p121 = scmp.ne.s32.totalorder %s112, %s113
      %p122 = scmp.eq.s32.totalorder %s20, 0
      %p123 = por %p121, %p122
      %p124 = scmp.ne.s32.totalorder %s112, %s113
      %p125 = scmp.eq.s32.totalorder %s21, 1
      %p126 = por %p124, %p125
      %p128 = scmp.ne.s32.totalorder %s113, %s127
      %p129 = scmp.eq.s32.totalorder %s21, 0
      %p130 = por %p128, %p129
      %s132 = sadd.s32 %s131, 1
      %p135 = scmp.eq.s32.totalorder %s15, 1
      %p136 = scmp.ne.s32.totalorder %s131, %s133
      %p137 = scmp.eq.s32.totalorder %s15, 0
      %p138 = por %p136, %p137
      %p139 = scmp.ne.s32.totalorder %s131, %s133
      %p140 = scmp.eq.s32.totalorder %s20, 1
      %p141 = por %p139, %p140
      %p142 = scmp.ne.s32.totalorder %s133, %s134
      %p143 = scmp.eq.s32.totalorder %s20, 0
      %p144 = por %p142, %p143
      %p145 = scmp.ne.s32.totalorder %s133, %s134
      %p146 = scmp.eq.s32.totalorder %s21, 1
      %p147 = por %p145, %p146
      %p149 = scmp.ne.s32.totalorder %s134, %s148
      %p150 = scmp.eq.s32.totalorder %s21, 0
      %p151 = por %p149, %p150
      %s153 = sadd.s32 %s152, 1
      %p156 = scmp.eq.s32.totalorder %s15, 1
      %p157 = scmp.ne.s32.totalorder %s152, %s154
      %p158 = scmp.eq.s32.totalorder %s15, 0
      %p159 = por %p157, %p158
      %p160 = scmp.ne.s32.totalorder %s152, %s154
      %p161 = scmp.eq.s32.totalorder %s20, 1
      %p162 = por %p160, %p161
      %p163 = scmp.ne.s32.totalorder %s154, %s155
      %p164 = scmp.eq.s32.totalorder %s20, 0
      %p165 = por %p163, %p164
      %p166 = scmp.ne.s32.totalorder %s154, %s155
      %p167 = scmp.eq.s32.totalorder %s21, 1
      %p168 = por %p166, %p167
      %p170 = scmp.ne.s32.totalorder %s155, %s169
      %p171 = scmp.eq.s32.totalorder %s21, 0
      %p172 = por %p170, %p171
      %s173 = ssub.s32 %s22, %s34
      %s174 = ssub.s32 %s23, %s30
      %s175 = sor.u32 %s173, %s174
      %p176 = scmp.eq.s32.totalorder %s175, 0
      %s178 = sadd.s32 %s177, 1
      %s179 = scalar_select %p176, %s177, %s178
      %p182 = pneg %p176
      %p183 = scmp.eq.s32.totalorder %s15, 1
      %p184 = por %p182, %p183
      %p185 = scmp.ne.s32.totalorder %s177, %s180
      %p186 = scmp.eq.s32.totalorder %s15, 0
      %p187 = por %p185, %p186
      %p188 = scmp.ne.s32.totalorder %s177, %s180
      %p189 = scmp.eq.s32.totalorder %s20, 1
      %p190 = por %p188, %p189
      %p191 = scmp.ne.s32.totalorder %s180, %s181
      %p192 = scmp.eq.s32.totalorder %s20, 0
      %p193 = por %p191, %p192
      %p194 = scmp.ne.s32.totalorder %s180, %s181
      %p195 = scmp.eq.s32.totalorder %s21, 1
      %p196 = por %p194, %p195
      %p198 = scmp.ne.s32.totalorder %s181, %s197
      %p199 = scmp.eq.s32.totalorder %s21, 0
      %p200 = por %p198, %p199
      %p201 = scmp.le.s32.totalorder 1, %s15
      %p202 = scmp.lt.s32.totalorder %s15, 3
      %p203 = pnand %p201, %p202
      %p204 = pneg %p203
      // Predicated region
      $region9: #{tpu_custom_call.1} parent=5 // pred_check
        _
      $region10: #{tpu_custom_call.1} parent=5 // pred_check_branch
        %206 = sbr.rel (%p203) target = $region12
      $region11: #{tpu_custom_call.1} parent=5 // pred_region
        %s207 = ssub.s32 %s15, 1
        // Predicated region
        $region13: #{tpu_custom_call.1} parent=11 // pred_check
          %p208 = pneg %p102
        $region14: #{tpu_custom_call.1} parent=11 // pred_check_branch
          %210 = sbr.rel (%p208) target = $region16
        $region15: #{tpu_custom_call.1} parent=11 // pred_region
          _
        $region16: #{tpu_custom_call.1} parent=11 // pred_fallthru
          _
        // Predicated region
        $region17: #{tpu_custom_call.1} parent=11 // pred_check
          %p211 = pneg %p123
        $region18: #{tpu_custom_call.1} parent=11 // pred_check_branch
          %213 = sbr.rel (%p211) target = $region20
        $region19: #{tpu_custom_call.1} parent=11 // pred_region
          _
        $region20: #{tpu_custom_call.1} parent=11 // pred_fallthru
          _
        // Predicated region
        $region21: #{tpu_custom_call.1} parent=11 // pred_check
          %p214 = pneg %p144
        $region22: #{tpu_custom_call.1} parent=11 // pred_check_branch
          %216 = sbr.rel (%p214) target = $region24
        $region23: #{tpu_custom_call.1} parent=11 // pred_region
          _
        $region24: #{tpu_custom_call.1} parent=11 // pred_fallthru
          _
        // Predicated region
        $region25: #{tpu_custom_call.1} parent=11 // pred_check
          %p217 = pneg %p165
        $region26: #{tpu_custom_call.1} parent=11 // pred_check_branch
          %219 = sbr.rel (%p217) target = $region28
        $region27: #{tpu_custom_call.1} parent=11 // pred_region
          _
        $region28: #{tpu_custom_call.1} parent=11 // pred_fallthru
          _
      $region12: #{tpu_custom_call.1} parent=5 // pred_fallthru
        _
      %p220 = scmp.lt.s32.totalorder %s15, 2
      // Predicated region
      $region29: #{tpu_custom_call.1} parent=5 // pred_check
        %p221 = pneg %p220
      $region30: #{tpu_custom_call.1} parent=5 // pred_check_branch
        %223 = sbr.rel (%p221) target = $region32
      $region31: #{tpu_custom_call.1} parent=5 // pred_region
        // Predicated region
        $region33: #{tpu_custom_call.1} parent=31 // pred_check
          %p224 = pneg %p49
        $region34: #{tpu_custom_call.1} parent=31 // pred_check_branch
          %226 = sbr.rel (%p224) target = $region36
        $region35: #{tpu_custom_call.1} parent=31 // pred_region
          %p227 = scmp.lt.s32.totalorder %s22, 1
          %s228 = scalar_select %p227, %s22, 1
          %p229 = scmp.lt.s32.totalorder %s23, 0
          %s230 = scalar_select %p229, %s23, 0
          %s231 = sadd.s32 %s230, %s228
          %s232 = smul.addr %s231, 4
          %s233 = scalar_lea.vmem %s0, %s232
        $region36: #{tpu_custom_call.1} parent=31 // pred_fallthru
          _
        // Predicated region
        $region37: #{tpu_custom_call.1} parent=31 // pred_check
          %p234 = pneg %p75
        $region38: #{tpu_custom_call.1} parent=31 // pred_check_branch
          %236 = sbr.rel (%p234) target = $region40
        $region39: #{tpu_custom_call.1} parent=31 // pred_region
          %p237 = scmp.lt.s32.totalorder %s22, 1
          %s238 = scalar_select %p237, %s22, 1
          %s239 = smul.addr %s238, 2
          %s240 = smul.addr %s239, 4
          %s241 = scalar_lea.vmem %s1, %s240
        $region40: #{tpu_custom_call.1} parent=31 // pred_fallthru
          _
      $region32: #{tpu_custom_call.1} parent=5 // pred_fallthru
        _
      %p242 = scmp.le.s32.totalorder 1, %s15
      %p243 = scmp.lt.s32.totalorder %s15, 3
      %p244 = pnand %p242, %p243
      %p245 = pneg %p244
      // Predicated region
      $region41: #{tpu_custom_call.1} parent=5 // pred_check
        _
      $region42: #{tpu_custom_call.1} parent=5 // pred_check_branch
        %247 = sbr.rel (%p244) target = $region44
      $region43: #{tpu_custom_call.1} parent=5 // pred_region
        %s248 = ssub.s32 %s15, 1
        %p249 = scmp.lt.s32.totalorder %s24, 1
        %s250 = scalar_select %p249, %s24, 1
        %p251 = scmp.lt.s32.totalorder %s25, 0
        %s252 = scalar_select %p251, %s25, 0
        %s253 = sadd.s32 %s252, %s250
        %s254 = smul.addr %s253, 4
        %s255 = scalar_lea.vmem %s0, %s254
        %p256 = pneg %p55
        %p257 = pneg %p52
        %p258 = scmp.lt.s32.totalorder %s24, 1
        %s259 = scalar_select %p258, %s24, 1
        %s260 = smul.addr %s259, 2
        %s261 = smul.addr %s260, 4
        %s262 = scalar_lea.vmem %s1, %s261
        %p263 = pneg %p81
        %p264 = pneg %p78
        %p265 = pneg %p102
        %p266 = pneg %p99
        %p267 = pneg %p123
        %p268 = pneg %p120
        %p269 = pneg %p144
        %p270 = pneg %p141
        %p271 = pneg %p165
        %p272 = pneg %p162
        %p273 = pneg %p193
        %p274 = pneg %p190
        %s275 = sand.u32 %s180, 1
        %s276 = scalar_lea.sflag [#allocation5], %s275
        %s277 = sand.u32 %s180, 1
        %s278 = smul.addr %s277, 8
        %s279 = scalar_lea.vmem [#allocation4], %s278
        %p280 = scmp.lt.s32.totalorder %s24, 1
        %s281 = scalar_select %p280, %s24, 1
        %p282 = scmp.lt.s32.totalorder %s25, 0
        %s283 = scalar_select %p282, %s25, 0
        %s284 = sadd.s32 %s283, %s281
        %s285 = smul.addr %s284, 4
        %s286 = scalar_lea.vmem %s0, %s285
        %p287 = scmp.lt.s32.totalorder %s24, 1
        %s288 = scalar_select %p287, %s24, 1
        %s289 = smul.addr %s288, 2
        %s290 = smul.addr %s289, 4
        %s291 = scalar_lea.vmem %s1, %s290
        %p293 = scmp.eq.s32.totalorder %s25, 0
        // Predicated region
        $region45: #{tpu_custom_call.1} parent=43 // pred_check
          %p294 = pneg %p293
        $region46: #{tpu_custom_call.1} parent=43 // pred_check_branch
          %296 = sbr.rel (%p294) target = $region48
        $region47: #{tpu_custom_call.1} parent=43 // pred_region
          %v297 = vld [vmem:[%s291] sm:$0xf]
          %v298 = vld [vmem:[%s291 + $0x4] sm:$0xf]
          %v299 = vld [vmem:[%s3] sm:$0xf]
          %v300 = vld [vmem:[%s3 + $0x4] sm:$0xf]
          %v301 = vld [vmem:[%s3 + $0x8] sm:$0xf]
          %v302 = vld [vmem:[%s3 + $0xc] sm:$0xf]
          %v305 = vunpack.c.l.b16 %v297
          %v306 = vunpack.c.l.b16 %v298
          %v307 = vpack.c.b16 %v306, %v305
          %v312 = vunpack.c.l.b16 %v299
          %v313 = vunpack.c.l.b16 %v300
          %v314 = vunpack.c.l.b16 %v301
          %v315 = vunpack.c.l.b16 %v302
          %v316 = vpack.c.b16 %v313, %v312
          %v317 = vpack.c.b16 %v315, %v314
          %vm320 = vcmask 261120
          %v322 = vsel %vm320, %v307, 0
          %324 = vmatprep.subr.bf16.mxu0 0
          %325 = vmatpush1.bf16.msra.mxu0 %v316
          %326 = vmatprep.subr.bf16.mxu0 0
          %327 = vmatpush1.bf16.msra.mxu0 %v317
          %328 = vmatprep.subr.bf16.mxu0 0
          %329 = vmatpush1.bf16.msra.mxu0 0
          %330 = vmatprep.subr.bf16.mxu0 0
          %331 = vmatpush1.bf16.msra.mxu0 0
          %332 = vmatprep.subr.bf16.mxu0 0
          %333 = vmatpush1.bf16.msra.mxu0 0
          %334 = vmatprep.subr.bf16.mxu0 0
          %335 = vmatpush1.bf16.msra.mxu0 0
          %336 = vmatprep.subr.bf16.mxu0 0
          %337 = vmatpush1.bf16.msra.mxu0 0
          %338 = vmatprep.subr.bf16.mxu0 0
          %339 = vmatpush1.bf16.msra.mxu0 0
          %340 = vmatprep.subr.bf16.mxu0 0
          %341 = vmatpush1.bf16.msra.mxu0 0
          %342 = vmatprep.subr.bf16.mxu0 0
          %343 = vmatpush1.bf16.msra.mxu0 0
          %344 = vmatprep.subr.bf16.mxu0 0
          %345 = vmatpush1.bf16.msra.mxu0 0
          %346 = vmatprep.subr.bf16.mxu0 0
          %347 = vmatpush1.bf16.msra.mxu0 0
          %348 = vmatprep.subr.bf16.mxu0 0
          %349 = vmatpush1.bf16.msra.mxu0 0
          %350 = vmatprep.subr.bf16.mxu0 0
          %351 = vmatpush1.bf16.msra.mxu0 0
          %352 = vmatprep.subr.bf16.mxu0 0
          %353 = vmatpush1.bf16.msra.mxu0 0
          %354 = vmatprep.subr.bf16.mxu0 0
          %355 = vmatpush1.bf16.msra.mxu0 0
          %356 = vmatprep.mubr.bf16.mxu0 0
          %357 = vmatmul.mubr.bf16.gmra.mrb[0].mxu0 %v322
          %v358 = vpop.f32.mrb[0].mxu0
          %v359 = vadd.f32 0.0, %v358
          %v360 = vpop.f32.mrb[0].mxu0
          %v361 = vpop.f32.mrb[0].mxu0
          %v362 = vadd.f32 0.0, %v361
          %v363 = vpop.f32.mrb[0].mxu0
          %364 = vdwg.mxu0
          %v365 = vpack.c.bf16 %v362, %v359
          %vm366 = vcmask 64512
          %367 = vst.msk [vmem:[#allocation2] sm:$0xff] %vm366, %v365
          %v368 = vld [vmem:[%s4] sm:$0xf]
          %v369 = vld [vmem:[%s4 + $0x4] sm:$0xf]
          %v370 = vld [vmem:[%s4 + $0x8] sm:$0xf]
          %v371 = vld [vmem:[%s4 + $0xc] sm:$0xf]
          %v376 = vunpack.c.l.b16 %v368
          %v377 = vunpack.c.l.b16 %v369
          %v378 = vunpack.c.l.b16 %v370
          %v379 = vunpack.c.l.b16 %v371
          %v380 = vpack.c.b16 %v377, %v376
          %v381 = vpack.c.b16 %v379, %v378
          %384 = vmatprep.subr.bf16.mxu0 0
          %385 = vmatpush1.bf16.msra.mxu0 %v380
          %386 = vmatprep.subr.bf16.mxu0 0
          %387 = vmatpush1.bf16.msra.mxu0 %v381
          %388 = vmatprep.subr.bf16.mxu0 0
          %389 = vmatpush1.bf16.msra.mxu0 0
          %390 = vmatprep.subr.bf16.mxu0 0
          %391 = vmatpush1.bf16.msra.mxu0 0
          %392 = vmatprep.subr.bf16.mxu0 0
          %393 = vmatpush1.bf16.msra.mxu0 0
          %394 = vmatprep.subr.bf16.mxu0 0
          %395 = vmatpush1.bf16.msra.mxu0 0
          %396 = vmatprep.subr.bf16.mxu0 0
          %397 = vmatpush1.bf16.msra.mxu0 0
          %398 = vmatprep.subr.bf16.mxu0 0
          %399 = vmatpush1.bf16.msra.mxu0 0
          %400 = vmatprep.subr.bf16.mxu0 0
          %401 = vmatpush1.bf16.msra.mxu0 0
          %402 = vmatprep.subr.bf16.mxu0 0
          %403 = vmatpush1.bf16.msra.mxu0 0
          %404 = vmatprep.subr.bf16.mxu0 0
          %405 = vmatpush1.bf16.msra.mxu0 0
          %406 = vmatprep.subr.bf16.mxu0 0
          %407 = vmatpush1.bf16.msra.mxu0 0
          %408 = vmatprep.subr.bf16.mxu0 0
          %409 = vmatpush1.bf16.msra.mxu0 0
          %410 = vmatprep.subr.bf16.mxu0 0
          %411 = vmatpush1.bf16.msra.mxu0 0
          %412 = vmatprep.subr.bf16.mxu0 0
          %413 = vmatpush1.bf16.msra.mxu0 0
          %414 = vmatprep.subr.bf16.mxu0 0
          %415 = vmatpush1.bf16.msra.mxu0 0
          %416 = vmatprep.mubr.bf16.mxu0 0
          %417 = vmatmul.mubr.bf16.gmra.mrb[0].mxu0 %v322
          %v418 = vpop.f32.mrb[0].mxu0
          %v419 = vadd.f32 0.0, %v418
          %v420 = vpop.f32.mrb[0].mxu0
          %v421 = vpop.f32.mrb[0].mxu0
          %v422 = vadd.f32 0.0, %v421
          %v423 = vpop.f32.mrb[0].mxu0
          %424 = vdwg.mxu0
          %v425 = vpack.c.bf16 %v422, %v419
          %426 = vst.msk [vmem:[#allocation3] sm:$0xff] %vm366, %v425
          %s427 = scalar_lea.vmem %s3, 16
          %v428 = vld [vmem:[%s427] sm:$0xf]
          %v429 = vld [vmem:[%s427 + $0x4] sm:$0xf]
          %v430 = vld [vmem:[%s427 + $0x8] sm:$0xf]
          %v431 = vld [vmem:[%s427 + $0xc] sm:$0xf]
          %v436 = vunpack.c.l.b16 %v428
          %v437 = vunpack.c.l.b16 %v429
          %v438 = vunpack.c.l.b16 %v430
          %v439 = vunpack.c.l.b16 %v431
          %v440 = vpack.c.b16 %v437, %v436
          %v441 = vpack.c.b16 %v439, %v438
          %444 = vmatprep.subr.bf16.mxu0 0
          %445 = vmatpush1.bf16.msra.mxu0 %v440
          %446 = vmatprep.subr.bf16.mxu0 0
          %447 = vmatpush1.bf16.msra.mxu0 %v441
          %448 = vmatprep.subr.bf16.mxu0 0
          %449 = vmatpush1.bf16.msra.mxu0 0
          %450 = vmatprep.subr.bf16.mxu0 0
          %451 = vmatpush1.bf16.msra.mxu0 0
          %452 = vmatprep.subr.bf16.mxu0 0
          %453 = vmatpush1.bf16.msra.mxu0 0
          %454 = vmatprep.subr.bf16.mxu0 0
          %455 = vmatpush1.bf16.msra.mxu0 0
          %456 = vmatprep.subr.bf16.mxu0 0
          %457 = vmatpush1.bf16.msra.mxu0 0
          %458 = vmatprep.subr.bf16.mxu0 0
          %459 = vmatpush1.bf16.msra.mxu0 0
          %460 = vmatprep.subr.bf16.mxu0 0
          %461 = vmatpush1.bf16.msra.mxu0 0
          %462 = vmatprep.subr.bf16.mxu0 0
          %463 = vmatpush1.bf16.msra.mxu0 0
          %464 = vmatprep.subr.bf16.mxu0 0
          %465 = vmatpush1.bf16.msra.mxu0 0
          %466 = vmatprep.subr.bf16.mxu0 0
          %467 = vmatpush1.bf16.msra.mxu0 0
          %468 = vmatprep.subr.bf16.mxu0 0
          %469 = vmatpush1.bf16.msra.mxu0 0
          %470 = vmatprep.subr.bf16.mxu0 0
          %471 = vmatpush1.bf16.msra.mxu0 0
          %472 = vmatprep.subr.bf16.mxu0 0
          %473 = vmatpush1.bf16.msra.mxu0 0
          %474 = vmatprep.subr.bf16.mxu0 0
          %475 = vmatpush1.bf16.msra.mxu0 0
          %476 = vmatprep.mubr.bf16.mxu0 0
          %477 = vmatmul.mubr.bf16.gmra.mrb[0].mxu0 %v322
          %v478 = vpop.f32.mrb[0].mxu0
          %v479 = vadd.f32 0.0, %v478
          %v480 = vpop.f32.mrb[0].mxu0
          %v481 = vpop.f32.mrb[0].mxu0
          %v482 = vadd.f32 0.0, %v481
          %v483 = vpop.f32.mrb[0].mxu0
          %484 = vdwg.mxu0
          %v485 = vpack.c.bf16 %v482, %v479
          %s486 = scalar_lea.vmem [#allocation2], 8
          %487 = vst.msk [vmem:[%s486] sm:$0xff] %vm366, %v485
          %s488 = scalar_lea.vmem %s4, 16
          %v489 = vld [vmem:[%s488] sm:$0xf]
          %v490 = vld [vmem:[%s488 + $0x4] sm:$0xf]
          %v491 = vld [vmem:[%s488 + $0x8] sm:$0xf]
          %v492 = vld [vmem:[%s488 + $0xc] sm:$0xf]
          %v497 = vunpack.c.l.b16 %v489
          %v498 = vunpack.c.l.b16 %v490
          %v499 = vunpack.c.l.b16 %v491
          %v500 = vunpack.c.l.b16 %v492
          %v501 = vpack.c.b16 %v498, %v497
          %v502 = vpack.c.b16 %v500, %v499
          %505 = vmatprep.subr.bf16.mxu0 0
          %506 = vmatpush1.bf16.msra.mxu0 %v501
          %507 = vmatprep.subr.bf16.mxu0 0
          %508 = vmatpush1.bf16.msra.mxu0 %v502
          %509 = vmatprep.subr.bf16.mxu0 0
          %510 = vmatpush1.bf16.msra.mxu0 0
          %511 = vmatprep.subr.bf16.mxu0 0
          %512 = vmatpush1.bf16.msra.mxu0 0
          %513 = vmatprep.subr.bf16.mxu0 0
          %514 = vmatpush1.bf16.msra.mxu0 0
          %515 = vmatprep.subr.bf16.mxu0 0
          %516 = vmatpush1.bf16.msra.mxu0 0
          %517 = vmatprep.subr.bf16.mxu0 0
          %518 = vmatpush1.bf16.msra.mxu0 0
          %519 = vmatprep.subr.bf16.mxu0 0
          %520 = vmatpush1.bf16.msra.mxu0 0
          %521 = vmatprep.subr.bf16.mxu0 0
          %522 = vmatpush1.bf16.msra.mxu0 0
          %523 = vmatprep.subr.bf16.mxu0 0
          %524 = vmatpush1.bf16.msra.mxu0 0
          %525 = vmatprep.subr.bf16.mxu0 0
          %526 = vmatpush1.bf16.msra.mxu0 0
          %527 = vmatprep.subr.bf16.mxu0 0
          %528 = vmatpush1.bf16.msra.mxu0 0
          %529 = vmatprep.subr.bf16.mxu0 0
          %530 = vmatpush1.bf16.msra.mxu0 0
          %531 = vmatprep.subr.bf16.mxu0 0
          %532 = vmatpush1.bf16.msra.mxu0 0
          %533 = vmatprep.subr.bf16.mxu0 0
          %534 = vmatpush1.bf16.msra.mxu0 0
          %535 = vmatprep.subr.bf16.mxu0 0
          %536 = vmatpush1.bf16.msra.mxu0 0
          %537 = vmatprep.mubr.bf16.mxu0 0
          %538 = vmatmul.mubr.bf16.gmra.mrb[0].mxu0 %v322
          %v539 = vpop.f32.mrb[0].mxu0
          %v540 = vadd.f32 0.0, %v539
          %v541 = vpop.f32.mrb[0].mxu0
          %v542 = vpop.f32.mrb[0].mxu0
          %v543 = vadd.f32 0.0, %v542
          %v544 = vpop.f32.mrb[0].mxu0
          %545 = vdwg.mxu0
          %v546 = vpack.c.bf16 %v543, %v540
          %s547 = scalar_lea.vmem [#allocation3], 8
          %548 = vst.msk [vmem:[%s547] sm:$0xff] %vm366, %v546
          %s549 = scalar_lea.vmem %s3, 32
          %v550 = vld [vmem:[%s549] sm:$0xf]
          %v551 = vld [vmem:[%s549 + $0x4] sm:$0xf]
          %v552 = vld [vmem:[%s549 + $0x8] sm:$0xf]
          %v553 = vld [vmem:[%s549 + $0xc] sm:$0xf]
          %v558 = vunpack.c.l.b16 %v550
          %v559 = vunpack.c.l.b16 %v551
          %v560 = vunpack.c.l.b16 %v552
          %v561 = vunpack.c.l.b16 %v553
          %v562 = vpack.c.b16 %v559, %v558
          %v563 = vpack.c.b16 %v561, %v560
          %566 = vmatprep.subr.bf16.mxu0 0
          %567 = vmatpush1.bf16.msra.mxu0 %v562
          %568 = vmatprep.subr.bf16.mxu0 0
          %569 = vmatpush1.bf16.msra.mxu0 %v563
          %570 = vmatprep.subr.bf16.mxu0 0
          %571 = vmatpush1.bf16.msra.mxu0 0
          %572 = vmatprep.subr.bf16.mxu0 0
          %573 = vmatpush1.bf16.msra.mxu0 0
          %574 = vmatprep.subr.bf16.mxu0 0
          %575 = vmatpush1.bf16.msra.mxu0 0
          %576 = vmatprep.subr.bf16.mxu0 0
          %577 = vmatpush1.bf16.msra.mxu0 0
          %578 = vmatprep.subr.bf16.mxu0 0
          %579 = vmatpush1.bf16.msra.mxu0 0
          %580 = vmatprep.subr.bf16.mxu0 0
          %581 = vmatpush1.bf16.msra.mxu0 0
          %582 = vmatprep.subr.bf16.mxu0 0
          %583 = vmatpush1.bf16.msra.mxu0 0
          %584 = vmatprep.subr.bf16.mxu0 0
          %585 = vmatpush1.bf16.msra.mxu0 0
          %586 = vmatprep.subr.bf16.mxu0 0
          %587 = vmatpush1.bf16.msra.mxu0 0
          %588 = vmatprep.subr.bf16.mxu0 0
          %589 = vmatpush1.bf16.msra.mxu0 0
          %590 = vmatprep.subr.bf16.mxu0 0
          %591 = vmatpush1.bf16.msra.mxu0 0
          %592 = vmatprep.subr.bf16.mxu0 0
          %593 = vmatpush1.bf16.msra.mxu0 0
          %594 = vmatprep.subr.bf16.mxu0 0
          %595 = vmatpush1.bf16.msra.mxu0 0
          %596 = vmatprep.subr.bf16.mxu0 0
          %597 = vmatpush1.bf16.msra.mxu0 0
          %598 = vmatprep.mubr.bf16.mxu0 0
          %599 = vmatmul.mubr.bf16.gmra.mrb[0].mxu0 %v322
          %v600 = vpop.f32.mrb[0].mxu0
          %v601 = vadd.f32 0.0, %v600
          %v602 = vpop.f32.mrb[0].mxu0
          %v603 = vpop.f32.mrb[0].mxu0
          %v604 = vadd.f32 0.0, %v603
          %v605 = vpop.f32.mrb[0].mxu0
          %606 = vdwg.mxu0
          %v607 = vpack.c.bf16 %v604, %v601
          %s608 = scalar_lea.vmem [#allocation2], 16
          %609 = vst.msk [vmem:[%s608] sm:$0xff] %vm366, %v607
          %s610 = scalar_lea.vmem %s4, 32
          %v611 = vld [vmem:[%s610] sm:$0xf]
          %v612 = vld [vmem:[%s610 + $0x4] sm:$0xf]
          %v613 = vld [vmem:[%s610 + $0x8] sm:$0xf]
          %v614 = vld [vmem:[%s610 + $0xc] sm:$0xf]
          %v619 = vunpack.c.l.b16 %v611
          %v620 = vunpack.c.l.b16 %v612
          %v621 = vunpack.c.l.b16 %v613
          %v622 = vunpack.c.l.b16 %v614
          %v623 = vpack.c.b16 %v620, %v619
          %v624 = vpack.c.b16 %v622, %v621
          %627 = vmatprep.subr.bf16.mxu0 0
          %628 = vmatpush1.bf16.msra.mxu0 %v623
          %629 = vmatprep.subr.bf16.mxu0 0
          %630 = vmatpush1.bf16.msra.mxu0 %v624
          %631 = vmatprep.subr.bf16.mxu0 0
          %632 = vmatpush1.bf16.msra.mxu0 0
          %633 = vmatprep.subr.bf16.mxu0 0
          %634 = vmatpush1.bf16.msra.mxu0 0
          %635 = vmatprep.subr.bf16.mxu0 0
          %636 = vmatpush1.bf16.msra.mxu0 0
          %637 = vmatprep.subr.bf16.mxu0 0
          %638 = vmatpush1.bf16.msra.mxu0 0
          %639 = vmatprep.subr.bf16.mxu0 0
          %640 = vmatpush1.bf16.msra.mxu0 0
          %641 = vmatprep.subr.bf16.mxu0 0
          %642 = vmatpush1.bf16.msra.mxu0 0
          %643 = vmatprep.subr.bf16.mxu0 0
          %644 = vmatpush1.bf16.msra.mxu0 0
          %645 = vmatprep.subr.bf16.mxu0 0
          %646 = vmatpush1.bf16.msra.mxu0 0
          %647 = vmatprep.subr.bf16.mxu0 0
          %648 = vmatpush1.bf16.msra.mxu0 0
          %649 = vmatprep.subr.bf16.mxu0 0
          %650 = vmatpush1.bf16.msra.mxu0 0
          %651 = vmatprep.subr.bf16.mxu0 0
          %652 = vmatpush1.bf16.msra.mxu0 0
          %653 = vmatprep.subr.bf16.mxu0 0
          %654 = vmatpush1.bf16.msra.mxu0 0
          %655 = vmatprep.subr.bf16.mxu0 0
          %656 = vmatpush1.bf16.msra.mxu0 0
          %657 = vmatprep.subr.bf16.mxu0 0
          %658 = vmatpush1.bf16.msra.mxu0 0
          %659 = vmatprep.mubr.bf16.mxu0 0
          %660 = vmatmul.mubr.bf16.gmra.mrb[0].mxu0 %v322
          %v661 = vpop.f32.mrb[0].mxu0
          %v662 = vadd.f32 0.0, %v661
          %v663 = vpop.f32.mrb[0].mxu0
          %v664 = vpop.f32.mrb[0].mxu0
          %v665 = vadd.f32 0.0, %v664
          %v666 = vpop.f32.mrb[0].mxu0
          %667 = vdwg.mxu0
          %v668 = vpack.c.bf16 %v665, %v662
          %s669 = scalar_lea.vmem [#allocation3], 16
          %670 = vst.msk [vmem:[%s669] sm:$0xff] %vm366, %v668
          %s671 = scalar_lea.vmem %s3, 48
          %v672 = vld [vmem:[%s671] sm:$0xf]
          %v673 = vld [vmem:[%s671 + $0x4] sm:$0xf]
          %v674 = vld [vmem:[%s671 + $0x8] sm:$0xf]
          %v675 = vld [vmem:[%s671 + $0xc] sm:$0xf]
          %v680 = vunpack.c.l.b16 %v672
          %v681 = vunpack.c.l.b16 %v673
          %v682 = vunpack.c.l.b16 %v674
          %v683 = vunpack.c.l.b16 %v675
          %v684 = vpack.c.b16 %v681, %v680
          %v685 = vpack.c.b16 %v683, %v682
          %688 = vmatprep.subr.bf16.mxu0 0
          %689 = vmatpush1.bf16.msra.mxu0 %v684
          %690 = vmatprep.subr.bf16.mxu0 0
          %691 = vmatpush1.bf16.msra.mxu0 %v685
          %692 = vmatprep.subr.bf16.mxu0 0
          %693 = vmatpush1.bf16.msra.mxu0 0
          %694 = vmatprep.subr.bf16.mxu0 0
          %695 = vmatpush1.bf16.msra.mxu0 0
          %696 = vmatprep.subr.bf16.mxu0 0
          %697 = vmatpush1.bf16.msra.mxu0 0
          %698 = vmatprep.subr.bf16.mxu0 0
          %699 = vmatpush1.bf16.msra.mxu0 0
          %700 = vmatprep.subr.bf16.mxu0 0
          %701 = vmatpush1.bf16.msra.mxu0 0
          %702 = vmatprep.subr.bf16.mxu0 0
          %703 = vmatpush1.bf16.msra.mxu0 0
          %704 = vmatprep.subr.bf16.mxu0 0
          %705 = vmatpush1.bf16.msra.mxu0 0
          %706 = vmatprep.subr.bf16.mxu0 0
          %707 = vmatpush1.bf16.msra.mxu0 0
          %708 = vmatprep.subr.bf16.mxu0 0
          %709 = vmatpush1.bf16.msra.mxu0 0
          %710 = vmatprep.subr.bf16.mxu0 0
          %711 = vmatpush1.bf16.msra.mxu0 0
          %712 = vmatprep.subr.bf16.mxu0 0
          %713 = vmatpush1.bf16.msra.mxu0 0
          %714 = vmatprep.subr.bf16.mxu0 0
          %715 = vmatpush1.bf16.msra.mxu0 0
          %716 = vmatprep.subr.bf16.mxu0 0
          %717 = vmatpush1.bf16.msra.mxu0 0
          %718 = vmatprep.subr.bf16.mxu0 0
          %719 = vmatpush1.bf16.msra.mxu0 0
          %720 = vmatprep.mubr.bf16.mxu0 0
          %721 = vmatmul.mubr.bf16.gmra.mrb[0].mxu0 %v322
          %v722 = vpop.f32.mrb[0].mxu0
          %v723 = vadd.f32 0.0, %v722
          %v724 = vpop.f32.mrb[0].mxu0
          %v725 = vpop.f32.mrb[0].mxu0
          %v726 = vadd.f32 0.0, %v725
          %v727 = vpop.f32.mrb[0].mxu0
          %728 = vdwg.mxu0
          %v729 = vpack.c.bf16 %v726, %v723
          %s730 = scalar_lea.vmem [#allocation2], 24
          %731 = vst.msk [vmem:[%s730] sm:$0xff] %vm366, %v729
          %s732 = scalar_lea.vmem %s4, 48
          %v733 = vld [vmem:[%s732] sm:$0xf]
          %v734 = vld [vmem:[%s732 + $0x4] sm:$0xf]
          %v735 = vld [vmem:[%s732 + $0x8] sm:$0xf]
          %v736 = vld [vmem:[%s732 + $0xc] sm:$0xf]
          %v741 = vunpack.c.l.b16 %v733
          %v742 = vunpack.c.l.b16 %v734
          %v743 = vunpack.c.l.b16 %v735
          %v744 = vunpack.c.l.b16 %v736
          %v745 = vpack.c.b16 %v742, %v741
          %v746 = vpack.c.b16 %v744, %v743
          %749 = vmatprep.subr.bf16.mxu0 0
          %750 = vmatpush1.bf16.msra.mxu0 %v745
          %751 = vmatprep.subr.bf16.mxu0 0
          %752 = vmatpush1.bf16.msra.mxu0 %v746
          %753 = vmatprep.subr.bf16.mxu0 0
          %754 = vmatpush1.bf16.msra.mxu0 0
          %755 = vmatprep.subr.bf16.mxu0 0
          %756 = vmatpush1.bf16.msra.mxu0 0
          %757 = vmatprep.subr.bf16.mxu0 0
          %758 = vmatpush1.bf16.msra.mxu0 0
          %759 = vmatprep.subr.bf16.mxu0 0
          %760 = vmatpush1.bf16.msra.mxu0 0
          %761 = vmatprep.subr.bf16.mxu0 0
          %762 = vmatpush1.bf16.msra.mxu0 0
          %763 = vmatprep.subr.bf16.mxu0 0
          %764 = vmatpush1.bf16.msra.mxu0 0
          %765 = vmatprep.subr.bf16.mxu0 0
          %766 = vmatpush1.bf16.msra.mxu0 0
          %767 = vmatprep.subr.bf16.mxu0 0
          %768 = vmatpush1.bf16.msra.mxu0 0
          %769 = vmatprep.subr.bf16.mxu0 0
          %770 = vmatpush1.bf16.msra.mxu0 0
          %771 = vmatprep.subr.bf16.mxu0 0
          %772 = vmatpush1.bf16.msra.mxu0 0
          %773 = vmatprep.subr.bf16.mxu0 0
          %774 = vmatpush1.bf16.msra.mxu0 0
          %775 = vmatprep.subr.bf16.mxu0 0
          %776 = vmatpush1.bf16.msra.mxu0 0
          %777 = vmatprep.subr.bf16.mxu0 0
          %778 = vmatpush1.bf16.msra.mxu0 0
          %779 = vmatprep.subr.bf16.mxu0 0
          %780 = vmatpush1.bf16.msra.mxu0 0
          %781 = vmatprep.mubr.bf16.mxu0 0
          %782 = vmatmul.mubr.bf16.gmra.mrb[0].mxu0 %v322
          %v783 = vpop.f32.mrb[0].mxu0
          %v784 = vadd.f32 0.0, %v783
          %v785 = vpop.f32.mrb[0].mxu0
          %v786 = vpop.f32.mrb[0].mxu0
          %v787 = vadd.f32 0.0, %v786
          %v788 = vpop.f32.mrb[0].mxu0
          %789 = vdwg.mxu0
          %v790 = vpack.c.bf16 %v787, %v784
          %s791 = scalar_lea.vmem [#allocation3], 24
          %792 = vst.msk [vmem:[%s791] sm:$0xff] %vm366, %v790
        $region48: #{tpu_custom_call.1} parent=43 // pred_fallthru
          _
        %v793 = vld [vmem:[%s286] sm:$0xf]
        loop: start=0, step=1, limit=4
        $region49: #{tpu_custom_call.1} parent=43 // loop_pre_header
          _
        $region50: #{tpu_custom_call.1} parent=43 // loop_header
          %s795 = sphi 0, %s799
          %p796 = scmp.ge.s32.totalorder %s795, 4
          %v800 = vphi 0.0, %v1025
        $region51: #{tpu_custom_call.1} parent=43 // loop_header_branch
          %798 = sbr.rel (%p796) target = $region55
        $region52: #{tpu_custom_call.1} parent=43 // loop_body
          %s801 = smul.u32 %s795, 4
          %s802 = smul.addr %s801, 4
          %s803 = scalar_lea.vmem %s2, %s802
          %v804 = vld [vmem:[%s803] sm:$0xf]
          %v805 = vld [vmem:[%s803 + $0x4] sm:$0xf]
          %v806 = vld [vmem:[%s803 + $0x8] sm:$0xf]
          %v807 = vld [vmem:[%s803 + $0xc] sm:$0xf]
          %v812 = vunpack.c.l.b16 %v804
          %v813 = vunpack.c.l.b16 %v805
          %v814 = vunpack.c.l.b16 %v806
          %v815 = vunpack.c.l.b16 %v807
          %v816 = vpack.c.b16 %v813, %v812
          %v817 = vpack.c.b16 %v815, %v814
          %vm820 = vcmask 261120
          %v822 = vsel %vm820, %v793, 0
          %824 = vmatprep.subr.bf16.mxu0 0
          %825 = vmatpush1.bf16.msra.mxu0 %v816
          %826 = vmatprep.subr.bf16.mxu0 0
          %827 = vmatpush1.bf16.msra.mxu0 %v817
          %828 = vmatprep.subr.bf16.mxu0 0
          %829 = vmatpush1.bf16.msra.mxu0 0
          %830 = vmatprep.subr.bf16.mxu0 0
          %831 = vmatpush1.bf16.msra.mxu0 0
          %832 = vmatprep.subr.bf16.mxu0 0
          %833 = vmatpush1.bf16.msra.mxu0 0
          %834 = vmatprep.subr.bf16.mxu0 0
          %835 = vmatpush1.bf16.msra.mxu0 0
          %836 = vmatprep.subr.bf16.mxu0 0
          %837 = vmatpush1.bf16.msra.mxu0 0
          %838 = vmatprep.subr.bf16.mxu0 0
          %839 = vmatpush1.bf16.msra.mxu0 0
          %840 = vmatprep.subr.bf16.mxu0 0
          %841 = vmatpush1.bf16.msra.mxu0 0
          %842 = vmatprep.subr.bf16.mxu0 0
          %843 = vmatpush1.bf16.msra.mxu0 0
          %844 = vmatprep.subr.bf16.mxu0 0
          %845 = vmatpush1.bf16.msra.mxu0 0
          %846 = vmatprep.subr.bf16.mxu0 0
          %847 = vmatpush1.bf16.msra.mxu0 0
          %848 = vmatprep.subr.bf16.mxu0 0
          %849 = vmatpush1.bf16.msra.mxu0 0
          %850 = vmatprep.subr.bf16.mxu0 0
          %851 = vmatpush1.bf16.msra.mxu0 0
          %852 = vmatprep.subr.bf16.mxu0 0
          %853 = vmatpush1.bf16.msra.mxu0 0
          %854 = vmatprep.subr.bf16.mxu0 0
          %855 = vmatpush1.bf16.msra.mxu0 0
          %856 = vmatprep.mubr.bf16.mxu0 0
          %857 = vmatmul.mubr.bf16.gmra.mrb[0].mxu0 %v822
          %v858 = vpop.f32.mrb[0].mxu0
          %v859 = vadd.f32 0.0, %v858
          %v860 = vpop.f32.mrb[0].mxu0
          %v861 = vpop.f32.mrb[0].mxu0
          %v862 = vpop.f32.mrb[0].mxu0
          %863 = vdwg.mxu0
          %v864 = vpack.c.bf16 %v859, %v859
          %s865 = smul.addr %s795, 8
          %s866 = scalar_lea.vmem [#allocation2], %s865
          %v867 = vld [vmem:[%s866] sm:$0xff]
          %vm868 = vcmask 64512
          %v870 = vsel %vm868, %v864, 0
          %v873 = vsel %vm868, %v867, 0
          %875 = vmatprep.subr.bf16.mxu0 0
          %876 = vmatpush1.bf16.xpose.msra.mxu0 %v873
          %877 = vmatprep.subr.bf16.mxu0 0
          %878 = vmatpush1.bf16.xpose.msra.mxu0 0
          %879 = vmatprep.subr.bf16.mxu0 0
          %880 = vmatpush1.bf16.xpose.msra.mxu0 0
          %881 = vmatprep.subr.bf16.mxu0 0
          %882 = vmatpush1.bf16.xpose.msra.mxu0 0
          %883 = vmatprep.subr.bf16.mxu0 0
          %884 = vmatpush1.bf16.xpose.msra.mxu0 0
          %885 = vmatprep.subr.bf16.mxu0 0
          %886 = vmatpush1.bf16.xpose.msra.mxu0 0
          %887 = vmatprep.subr.bf16.mxu0 0
          %888 = vmatpush1.bf16.xpose.msra.mxu0 0
          %889 = vmatprep.subr.bf16.mxu0 0
          %890 = vmatpush1.bf16.xpose.msra.mxu0 0
          %891 = vmatprep.subr.bf16.mxu0 0
          %892 = vmatpush1.bf16.xpose.msra.mxu0 0
          %893 = vmatprep.subr.bf16.mxu0 0
          %894 = vmatpush1.bf16.xpose.msra.mxu0 0
          %895 = vmatprep.subr.bf16.mxu0 0
          %896 = vmatpush1.bf16.xpose.msra.mxu0 0
          %897 = vmatprep.subr.bf16.mxu0 0
          %898 = vmatpush1.bf16.xpose.msra.mxu0 0
          %899 = vmatprep.subr.bf16.mxu0 0
          %900 = vmatpush1.bf16.xpose.msra.mxu0 0
          %901 = vmatprep.subr.bf16.mxu0 0
          %902 = vmatpush1.bf16.xpose.msra.mxu0 0
          %903 = vmatprep.subr.bf16.mxu0 0
          %904 = vmatpush1.bf16.xpose.msra.mxu0 0
          %905 = vmatprep.subr.bf16.mxu0 0
          %906 = vmatpush1.bf16.xpose.msra.mxu0 0
          %907 = vmatprep.mubr.bf16.mxu0 0
          %908 = vmatmul.mubr.bf16.gmra.mrb[0].mxu0 %v870
          %v909 = vpop.f32.mrb[0].mxu0
          %v910 = vadd.f32 0.0, %v909
          %v911 = vpop.f32.mrb[0].mxu0
          %v912 = vpop.f32.mrb[0].mxu0
          %v913 = vpop.f32.mrb[0].mxu0
          %914 = vdwg.mxu0
          %vm915 = vcmask 130048
          %v916 = vsel %vm915, %v910, -inf
          %917 = vmax.xlane.f32.xlu0 %v916
          %v918 = vpop.xlane.xlu0 %917
          %v919 = vsub.f32 %v910, %v918
          %v920 = vmul.f32 %v919, 1.442695
          %v921 = vpow.pop %v920
          %v922 = vsel %vm915, %v921, 0.0
          %923 = vadd.xlane.f32.xlu0 %v922
          %v924 = vpop.xlane.xlu0 %923
          %v925 = vrcp.pop %v924
          %v926 = vmul.f32 %v921, %v925
          %v927 = vpack.c.bf16 %v926, %v926
          %s928 = smul.addr %s795, 8
          %s929 = scalar_lea.vmem [#allocation3], %s928
          %v930 = vld [vmem:[%s929] sm:$0xff]
          %v932 = vsel %vm915, %v927, 0
          %934 = vmatprep.subr.bf16.mxu0 0
          %935 = vmatpush1.bf16.msra.mxu0 %v930
          %936 = vmatprep.subr.bf16.mxu0 0
          %937 = vmatpush1.bf16.msra.mxu0 0
          %938 = vmatprep.subr.bf16.mxu0 0
          %939 = vmatpush1.bf16.msra.mxu0 0
          %940 = vmatprep.subr.bf16.mxu0 0
          %941 = vmatpush1.bf16.msra.mxu0 0
          %942 = vmatprep.subr.bf16.mxu0 0
          %943 = vmatpush1.bf16.msra.mxu0 0
          %944 = vmatprep.subr.bf16.mxu0 0
          %945 = vmatpush1.bf16.msra.mxu0 0
          %946 = vmatprep.subr.bf16.mxu0 0
          %947 = vmatpush1.bf16.msra.mxu0 0
          %948 = vmatprep.subr.bf16.mxu0 0
          %949 = vmatpush1.bf16.msra.mxu0 0
          %950 = vmatprep.subr.bf16.mxu0 0
          %951 = vmatpush1.bf16.msra.mxu0 0
          %952 = vmatprep.subr.bf16.mxu0 0
          %953 = vmatpush1.bf16.msra.mxu0 0
          %954 = vmatprep.subr.bf16.mxu0 0
          %955 = vmatpush1.bf16.msra.mxu0 0
          %956 = vmatprep.subr.bf16.mxu0 0
          %957 = vmatpush1.bf16.msra.mxu0 0
          %958 = vmatprep.subr.bf16.mxu0 0
          %959 = vmatpush1.bf16.msra.mxu0 0
          %960 = vmatprep.subr.bf16.mxu0 0
          %961 = vmatpush1.bf16.msra.mxu0 0
          %962 = vmatprep.subr.bf16.mxu0 0
          %963 = vmatpush1.bf16.msra.mxu0 0
          %964 = vmatprep.subr.bf16.mxu0 0
          %965 = vmatpush1.bf16.msra.mxu0 0
          %966 = vmatprep.mubr.bf16.mxu0 0
          %967 = vmatmul.mubr.bf16.gmra.mrb[0].mxu0 %v932
          %v968 = vpop.f32.mrb[0].mxu0
          %v969 = vadd.f32 0.0, %v968
          %v970 = vpop.f32.mrb[0].mxu0
          %v971 = vpop.f32.mrb[0].mxu0
          %v972 = vpop.f32.mrb[0].mxu0
          %973 = vdwg.mxu0
          %v974 = vpack.c.bf16 %v969, %v969
          %s975 = smul.addr %s795, 4
          %s976 = scalar_lea.vmem %s5, %s975
          %v977 = vld [vmem:[%s976] sm:$0xf]
          %v979 = vsel %vm868, %v974, 0
          %vm981 = vcmask 1043456
          %v983 = vsel %vm981, %v977, 0
          %985 = vmatprep.subr.bf16.mxu0 0
          %986 = vmatpush1.bf16.msra.mxu0 %v983
          %987 = vmatprep.subr.bf16.mxu0 0
          %988 = vmatpush1.bf16.msra.mxu0 0
          %989 = vmatprep.subr.bf16.mxu0 0
          %990 = vmatpush1.bf16.msra.mxu0 0
          %991 = vmatprep.subr.bf16.mxu0 0
          %992 = vmatpush1.bf16.msra.mxu0 0
          %993 = vmatprep.subr.bf16.mxu0 0
          %994 = vmatpush1.bf16.msra.mxu0 0
          %995 = vmatprep.subr.bf16.mxu0 0
          %996 = vmatpush1.bf16.msra.mxu0 0
          %997 = vmatprep.subr.bf16.mxu0 0
          %998 = vmatpush1.bf16.msra.mxu0 0
          %999 = vmatprep.subr.bf16.mxu0 0
          %1000 = vmatpush1.bf16.msra.mxu0 0
          %1001 = vmatprep.subr.bf16.mxu0 0
          %1002 = vmatpush1.bf16.msra.mxu0 0
          %1003 = vmatprep.subr.bf16.mxu0 0
          %1004 = vmatpush1.bf16.msra.mxu0 0
          %1005 = vmatprep.subr.bf16.mxu0 0
          %1006 = vmatpush1.bf16.msra.mxu0 0
          %1007 = vmatprep.subr.bf16.mxu0 0
          %1008 = vmatpush1.bf16.msra.mxu0 0
          %1009 = vmatprep.subr.bf16.mxu0 0
          %1010 = vmatpush1.bf16.msra.mxu0 0
          %1011 = vmatprep.subr.bf16.mxu0 0
          %1012 = vmatpush1.bf16.msra.mxu0 0
          %1013 = vmatprep.subr.bf16.mxu0 0
          %1014 = vmatpush1.bf16.msra.mxu0 0
          %1015 = vmatprep.subr.bf16.mxu0 0
          %1016 = vmatpush1.bf16.msra.mxu0 0
          %1017 = vmatprep.mubr.bf16.mxu0 0
          %1018 = vmatmul.mubr.bf16.gmra.mrb[0].mxu0 %v979
          %v1019 = vpop.f32.mrb[0].mxu0
          %v1020 = vadd.f32 0.0, %v1019
          %v1021 = vpop.f32.mrb[0].mxu0
          %v1022 = vpop.f32.mrb[0].mxu0
          %v1023 = vpop.f32.mrb[0].mxu0
          %1024 = vdwg.mxu0
          %v1025 = vadd.f32 %v800, %v1020
        $region53: #{tpu_custom_call.1} parent=43 // loop_footer
          %s799 = sadd.s32 1, %s795
        $region54: #{tpu_custom_call.1} parent=43 // loop_footer_branch
          %794 = sbr.rel target = $region50
        $region55: #{tpu_custom_call.1} parent=43 // loop_exit
          _
        %vm1026 = vcmask 261120
        %1027 = vst.msk [vmem:[%s279] sm:$0xff] %vm1026, %v800
        %s1028 = sand.u32 %s180, 1
        %s1029 = scalar_lea.sflag [#allocation5], %s1028
        %s1030 = sand.u32 %s180, 1
        %s1031 = smul.addr %s1030, 8
        %s1032 = scalar_lea.vmem [#allocation4], %s1031
        // Predicated region
        $region56: #{tpu_custom_call.1} parent=43 // pred_check
          %p1033 = pneg %p190
        $region57: #{tpu_custom_call.1} parent=43 // pred_check_branch
          %1035 = sbr.rel (%p1033) target = $region59
        $region58: #{tpu_custom_call.1} parent=43 // pred_region
          %s1037 = ssub.s32 128, 128
          %1038 = vsyncadd %s1029, %s1037
          %s1039 = sadd.s32 %s25, %s24
          %s1040 = smul.addr %s1039, 128
          %s1041 = scalar_lea.hbm %s6, %s1040
          %s1043 = sshll.u32 %s1032, 4
          %s1044 = int_to_ptr.vmem [resolvable:$true] %s1043
          %1046 = dma.vmem_to_hbm [thread:$0]  %s1044, 128, %s1041, %s1029
        $region59: #{tpu_custom_call.1} parent=43 // pred_fallthru
          _
      $region44: #{tpu_custom_call.1} parent=5 // pred_fallthru
        _
      %p1047 = scmp.le.s32.totalorder 2, %s15
      // Predicated region
      $region60: #{tpu_custom_call.1} parent=5 // pred_check
        %p1048 = pneg %p1047
      $region61: #{tpu_custom_call.1} parent=5 // pred_check_branch
        %1050 = sbr.rel (%p1048) target = $region63
      $region62: #{tpu_custom_call.1} parent=5 // pred_region
        %s1051 = ssub.s32 %s15, 2
        // Predicated region
        $region64: #{tpu_custom_call.1} parent=62 // pred_check
          %p1052 = pneg %p196
        $region65: #{tpu_custom_call.1} parent=62 // pred_check_branch
          %1054 = sbr.rel (%p1052) target = $region67
        $region66: #{tpu_custom_call.1} parent=62 // pred_region
          %s1055 = sand.u32 %s181, 1
          %s1056 = scalar_lea.sflag [#allocation5], %s1055
          %s1057 = sand.u32 %s181, 1
          %s1058 = smul.addr %s1057, 8
          %s1059 = scalar_lea.vmem [#allocation4], %s1058
          %1060 = dma.done %s1056, 128
        $region67: #{tpu_custom_call.1} parent=62 // pred_fallthru
          _
      $region63: #{tpu_custom_call.1} parent=5 // pred_fallthru
        _
    $region6: #{tpu_custom_call.1} parent=1 // loop_footer
      %s19 = sadd.s32 1, %s15
    $region7: #{tpu_custom_call.1} parent=1 // loop_footer_branch
      %14 = sbr.rel target = $region3
    $region8: #{tpu_custom_call.1} parent=1 // loop_exit
      _
    %1061 = vsyncpa [#allocation5], 1
    %s1062 = scalar_lea.sflag [#allocation5], 1
    %1063 = vsyncpa %s1062, 1

</llo_original>
